<compile_context>
chip_gen: v7x
topology: tpu7x:2x2x1
jax: 0.10.0
libtpu: 0.0.40
codegen_flags: <defaults>
</compile_context>

<pallas_src>
import functools

import jax
import jax.numpy as jnp
from jax import lax
from jax.experimental import pallas as pl
from jax.experimental.pallas import tpu as pltpu

EPS = 1e-5                       # nn.InstanceNorm2d default eps
_SQRT_HALF = 0.7071067811865476


# ----------------------------- in-kernel math helpers -----------------------------

def _erf(z):
    """Abramowitz & Stegun 7.1.26 erf (|err| ~ 1.5e-7), exp/mul/add only.

    The 1/(1+p*|z|) divide uses an approximate EUP reciprocal + one Newton step so the
    VALU slot is not burdened with a full-precision divide (matters on v7x where this
    kernel can become compute-bound)."""
    az = jnp.abs(z)
    d = 1.0 + 0.3275911 * az
    r = pl.reciprocal(d, approx=True)
    t = r * (2.0 - d * r)                       # Newton refinement -> ~f32 accuracy
    poly = t * (0.254829592 + t * (-0.284496736 + t * (1.421413741
               + t * (-1.453152027 + t * 1.061405429))))
    e = 1.0 - poly * jnp.exp(-az * az)
    return jnp.where(z >= 0.0, e, -e)


def _gelu(x):
    # Exact-form GELU (matches nn.GELU default).
    return 0.5 * x * (1.0 + _erf(x * _SQRT_HALF))


# ----------------------------------- kernels -----------------------------------

def _gelu_adain_kernel(x_ref, p_ref, o_ref, *, inv_hw):
    """Single HW block per row tile: bias + GELU + InstanceNorm + affine in one pass."""
    p = p_ref[...].astype(jnp.float32)            # (tile_r, 3): [gamma, beta, conv_bias]
    gamma, beta, bias = p[:, 0:1], p[:, 1:2], p[:, 2:3]

    g = _gelu(x_ref[...].astype(jnp.float32) + bias)          # (tile_r, HW)

    # Single-pass InstanceNorm statistics over the true spatial size (per-row lane reduce).
    mean = jnp.sum(g, axis=-1, keepdims=True) * inv_hw
    ex2 = jnp.sum(g * g, axis=-1, keepdims=True) * inv_hw
    var = jnp.maximum(ex2 - mean * mean, 0.0)                  # biased variance
    inv_std = lax.rsqrt(var + EPS)

    scale = gamma * inv_std                                    # fold norm + affine -> 1 FMA/elem
    shift = beta - mean * scale
    o_ref[...] = (g * scale + shift).astype(o_ref.dtype)


def _gelu_adain_hw_tiled_kernel(x_ref, p_ref, o_ref,
                                sum_ref, sq_ref, scale_ref, shift_ref,
                                *, n_hw, tile_hw, hw, inv_hw):
    """Two-sweep fallback for very large H*W: j < n_hw accumulates per-row sum / sum^2,
    j >= n_hw re-reads the input and applies the folded scale/shift."""
    j = pl.program_id(1)

    p = p_ref[...].astype(jnp.float32)            # (tile_r, 3): [gamma, beta, conv_bias]
    gamma, beta, bias = p[:, 0:1], p[:, 1:2], p[:, 2:3]
    g = _gelu(x_ref[...].astype(jnp.float32) + bias)          # (tile_r, tile_hw)

    @pl.when(j == 0)
    def _():
        sum_ref[...] = jnp.zeros_like(sum_ref)
        sq_ref[...] = jnp.zeros_like(sq_ref)

    @pl.when(j < n_hw)                             # phase 1: statistics sweep
    def _():
        col = lax.broadcasted_iota(jnp.int32, g.shape, 1)
        valid = (j * tile_hw + col) < hw           # mask ragged last HW block
        gm = jnp.where(valid, g, 0.0)
        sum_ref[...] += jnp.sum(gm, axis=-1, keepdims=True)
        sq_ref[...] += jnp.sum(gm * gm, axis=-1, keepdims=True)

    @pl.when(j == n_hw - 1)                        # finalize statistics
    def _():
        # TODO(synk): single-pass E[x^2]-E[x]^2 in f32; switch to a shifted/Welford form if
        # extreme mean/std ratios ever show up at very large H*W.
        mean = sum_ref[...] * inv_hw
        var = jnp.maximum(sq_ref[...] * inv_hw - mean * mean, 0.0)
        inv_std = lax.rsqrt(var + EPS)
        scale_ref[...] = gamma * inv_std
        shift_ref[...] = beta - mean * scale_ref[...]

    @pl.when(j >= n_hw)                            # phase 2: normalize + affine, write out
    def _():
        o_ref[...] = (g * scale_ref[...] + shift_ref[...]).astype(o_ref.dtype)


# --------------------------------- host-side sizing ---------------------------------

def _round_up(x, m):
    return (x + m - 1) // m * m


def _cdiv(a, b):
    return (a + b - 1) // b


def _vmem_capacity_bytes():
    try:
        cap = int(getattr(pltpu.get_tpu_info(), "vmem_capacity_bytes"))
        if cap > 0:
            return cap
    except Exception:
        pass
    return 64 << 20          # conservative (v7x-sized) fallback


def _pick_rows(num_rows, bytes_per_row, budget, min_grid):
    rows = max(8, int(budget // max(int(bytes_per_row), 1)))
    if min_grid > 1:
        # Guarantee >= min_grid grid steps so pipelining / both v7x TensorCores are used.
        rows = min(rows, max(8, _round_up(_cdiv(num_rows, min_grid), 8)))
    rows = max(8, rows // 8 * 8)
    if rows >= num_rows:
        rows = num_rows      # single full block along rows (block dim == full dim is legal)
    return rows


# --------------------------------- fused wrapper ---------------------------------

def fused_gelu_adain(x_rows, params, *, force_hw_tile=None):
    """x_rows: (R, HW) conv output rows (NO bias added), one row per (n, c) instance.
    params: (R, 3) float32 columns [gamma, beta, conv_bias].
    Returns AdaIN(GELU(x + bias)) with the same shape/dtype as x_rows."""
    R, HW = x_rows.shape
    dtype = x_rows.dtype
    itemsize = jnp.dtype(dtype).itemsize

    cap = _vmem_capacity_bytes()
    budget = min(max(cap // 4, 8 << 20), 48 << 20)      # resident-block budget, per generation
    bytes_per_elem = 4 * itemsize + 8                    # in/out double-buffered + f32 intermediate
    hw_lanes = _round_up(HW, 128)                        # VMEM lane-padded width
    bytes_per_row = bytes_per_elem * hw_lanes

    use_hw_tiling = (force_hw_tile is not None) or (8 * bytes_per_row > budget)

    if not use_hw_tiling:
        tile_r = _pick_rows(R, bytes_per_row, budget, min_grid=4)
        grid_r = _cdiv(R, tile_r)
        block_bytes = bytes_per_row * tile_r
        vmem_limit = int(min(cap * 3 // 4, max(32 << 20, block_bytes + (8 << 20))))

        kernel = functools.partial(_gelu_adain_kernel, inv_hw=1.0 / float(HW))
        return pl.pallas_call(
            kernel,
            out_shape=jax.ShapeDtypeStruct((R, HW), dtype),
            grid_spec=pltpu.PrefetchScalarGridSpec(
                num_scalar_prefetch=0,
                grid=(grid_r,),
                in_specs=[
                    pl.BlockSpec((tile_r, HW), lambda i: (i, 0)),   # activations (unpadded)
                    pl.BlockSpec((tile_r, 3), lambda i: (i, 0)),    # [gamma, beta, bias]
                ],
                out_specs=pl.BlockSpec((tile_r, HW), lambda i: (i, 0)),
            ),
            compiler_params=pltpu.CompilerParams(
                dimension_semantics=("parallel",),
                vmem_limit_bytes=vmem_limit,
            ),
        )(x_rows, params)

    # ---------- HW-tiled fallback (very large H*W, or forced for testing) ----------
    if force_hw_tile is not None:
        tile_hw = int(force_hw_tile)
    else:
        tile_hw = budget // (8 * bytes_per_elem)
    tile_hw = max(128, (tile_hw // 128) * 128)
    if tile_hw >= HW:
        tile_hw = HW
    n_hw = _cdiv(HW, tile_hw)

    tile_r = _pick_rows(R, bytes_per_elem * tile_hw, budget, min_grid=2)
    grid_r = _cdiv(R, tile_r)
    block_bytes = bytes_per_elem * tile_hw * tile_r
    vmem_limit = int(min(cap * 3 // 4, max(32 << 20, block_bytes + (8 << 20))))

    kernel = functools.partial(_gelu_adain_hw_tiled_kernel,
                               n_hw=n_hw, tile_hw=tile_hw, hw=HW, inv_hw=1.0 / float(HW))
    return pl.pallas_call(
        kernel,
        out_shape=jax.ShapeDtypeStruct((R, HW), dtype),
        grid_spec=pltpu.PrefetchScalarGridSpec(
            num_scalar_prefetch=0,
            grid=(grid_r, 2 * n_hw),          # j < n_hw: stats sweep; j >= n_hw: output sweep
            in_specs=[
                pl.BlockSpec((tile_r, tile_hw), lambda i, j: (i, j % n_hw)),
                pl.BlockSpec((tile_r, 3), lambda i, j: (i, 0)),
            ],
            out_specs=pl.BlockSpec((tile_r, tile_hw),
                                   lambda i, j: (i, jnp.maximum(j - n_hw, 0))),
            scratch_shapes=[pltpu.VMEM((tile_r, 1), jnp.float32)] * 4,
        ),
        compiler_params=pltpu.CompilerParams(
            dimension_semantics=("parallel", "arbitrary"),
            vmem_limit_bytes=vmem_limit,
        ),
    )(x_rows, params)


# ------------------------------- EncoderBlock forward -------------------------------

def encoder_block_forward(x, style, conv_w, conv_b, fc_w, fc_b, *, stride, padding,
                          force_hw_tile=None):
    """PyTorch EncoderBlock.forward (eval): conv5x5 -> GELU -> AdaIN(style) -> dropout."""
    # TODO(synk): the 5x5 conv stays on XLA's conv (already MXU-optimal); no hand-written Pallas conv.
    y = lax.conv_general_dilated(
        x, conv_w,
        window_strides=(stride, stride),
        padding=[(padding, padding), (padding, padding)],
        dimension_numbers=("NCHW", "OIHW", "NCHW"))

    N, C, H, W = y.shape
    R = N * C

    # Hoisted fc(style): per-(n,c) gamma/beta; conv bias folded in as a third per-row scalar.
    h = style.astype(jnp.float32) @ fc_w.astype(jnp.float32).T + fc_b.astype(jnp.float32)
    gamma = h[:, :C].reshape(R, 1)
    beta = h[:, C:].reshape(R, 1)
    bias = jnp.broadcast_to(conv_b.astype(jnp.float32)[None, :], (N, C)).reshape(R, 1)
    params = jnp.concatenate([gamma, beta, bias], axis=1)       # (R, 3) f32

    out = fused_gelu_adain(y.reshape(R, H * W), params, force_hw_tile=force_hw_tile)
    # TODO(synk): nn.Dropout is identity in eval mode; training-mode dropout not implemented.
    return out.reshape(N, C, H, W)


# ------------------------------------ reference ------------------------------------

def _reference(x, style, conv_w, conv_b, fc_w, fc_b, *, stride, padding):
    y = lax.conv_general_dilated(
        x, conv_w,
        window_strides=(stride, stride),
        padding=[(padding, padding), (padding, padding)],
        dimension_numbers=("NCHW", "OIHW", "NCHW")) + conv_b[None, :, None, None]
    y = jax.nn.gelu(y, approximate=False)
    mean = jnp.mean(y, axis=(2, 3), keepdims=True)
    var = jnp.var(y, axis=(2, 3), keepdims=True)                # biased, like InstanceNorm2d
    yn = (y - mean) / jnp.sqrt(var + EPS)
    C = y.shape[1]
    h = style.astype(jnp.float32) @ fc_w.astype(jnp.float32).T + fc_b.astype(jnp.float32)
    return h[:, :C][:, :, None, None] * yn + h[:, C:][:, :, None, None]


if __name__ == "__main__":
    key = jax.random.PRNGKey(0)
    S = 8
    stride, padding = 1, 2

    def check(out, ref, tag):
        assert out.shape == ref.shape, (tag, out.shape, ref.shape)
        err = float(jnp.max(jnp.abs(out - ref)))
        assert jnp.allclose(out, ref, atol=2e-4, rtol=2e-4), f"{tag}: max err {err}"

    # 1) Main fused path: N=2, C_out=4, 16x16.
    N, C_in, C_out, H, W = 2, 3, 4, 16, 16
    k = jax.random.split(key, 6)
    x = jax.random.normal(k[0], (N, C_in, H, W), dtype=jnp.float32)
    style = jax.random.normal(k[1], (N, S), dtype=jnp.float32)
    conv_w = jax.random.normal(k[2], (C_out, C_in, 5, 5), dtype=jnp.float32) * 0.1
    conv_b = jax.random.normal(k[3], (C_out,), dtype=jnp.float32) * 0.1
    fc_w = jax.random.normal(k[4], (2 * C_out, S), dtype=jnp.float32) * 0.1
    fc_b = jax.random.normal(k[5], (2 * C_out,), dtype=jnp.float32) * 0.1

    out = encoder_block_forward(x, style, conv_w, conv_b, fc_w, fc_b,
                                stride=stride, padding=padding)
    jax.block_until_ready(out)
    check(out, _reference(x, style, conv_w, conv_b, fc_w, fc_b,
                          stride=stride, padding=padding), "main")

    # 2) Multi-step grid with a ragged last row block: C_out=20 -> R=40, tile_r=16, 3 steps.
    C_out2 = 20
    k2 = jax.random.split(jax.random.PRNGKey(1), 4)
    conv_w2 = jax.random.normal(k2[0], (C_out2, C_in, 5, 5), dtype=jnp.float32) * 0.1
    conv_b2 = jax.random.normal(k2[1], (C_out2,), dtype=jnp.float32) * 0.1
    fc_w2 = jax.random.normal(k2[2], (2 * C_out2, S), dtype=jnp.float32) * 0.1
    fc_b2 = jax.random.normal(k2[3], (2 * C_out2,), dtype=jnp.float32) * 0.1
    out2 = encoder_block_forward(x, style, conv_w2, conv_b2, fc_w2, fc_b2,
                                 stride=stride, padding=padding)
    jax.block_until_ready(out2)
    check(out2, _reference(x, style, conv_w2, conv_b2, fc_w2, fc_b2,
                           stride=stride, padding=padding), "ragged-rows")

    # 3) HW-tiled fallback path (forced), ragged spatial size: 12x12 -> HW=144 (2 HW tiles).
    x3 = jax.random.normal(jax.random.PRNGKey(2), (N, C_in, 12, 12), dtype=jnp.float32)
    out3 = encoder_block_forward(x3, style, conv_w, conv_b, fc_w, fc_b,
                                 stride=stride, padding=padding, force_hw_tile=128)
    jax.block_until_ready(out3)
    check(out3, _reference(x3, style, conv_w, conv_b, fc_w, fc_b,
                           stride=stride, padding=padding), "hw-tiled")

    print("KERNEL_OK")
</pallas_src>

<mosaic_0001>
module attributes {stable_mosaic.version = 11 : i64} {
  func.func @_gelu_adain_kernel(%arg0: i32, %arg1: memref<8x256xf32, #tpu.memory_space<vmem>>, %arg2: memref<8x3xf32, #tpu.memory_space<vmem>>, %arg3: memref<8x256xf32, #tpu.memory_space<vmem>>) attributes {dimension_semantics = [#tpu.dimension_semantics<parallel>], iteration_bounds = array<i64: 1>, scalar_prefetch = 0 : i64, scratch_operands = 0 : i64, tpu.core_type = #tpu.core_type<tc>, window_params = [{transform_indices = @transform_0, window_bounds = array<i64: 8, 256>}, {transform_indices = @transform_1, window_bounds = array<i64: 8, 3>}, {transform_indices = @transform_2, window_bounds = array<i64: 8, 256>}]} {
    %c0 = arith.constant 0 : index
    %c0_0 = arith.constant 0 : index
    %0 = vector.load %arg2[%c0, %c0_0] : memref<8x3xf32, #tpu.memory_space<vmem>>, vector<8x3xf32>
    %1 = vector.extract_strided_slice %0 {offsets = [0, 0], sizes = [8, 1], strides = [1, 1]} : vector<8x3xf32> to vector<8x1xf32>
    %2 = vector.extract_strided_slice %0 {offsets = [0, 1], sizes = [8, 1], strides = [1, 1]} : vector<8x3xf32> to vector<8x1xf32>
    %3 = vector.extract_strided_slice %0 {offsets = [0, 2], sizes = [8, 1], strides = [1, 1]} : vector<8x3xf32> to vector<8x1xf32>
    %c0_1 = arith.constant 0 : index
    %c0_2 = arith.constant 0 : index
    %4 = vector.load %arg1[%c0_1, %c0_2] : memref<8x256xf32, #tpu.memory_space<vmem>>, vector<8x256xf32>
    %5 = vector.broadcast %3 : vector<8x1xf32> to vector<8x256xf32>
    %6 = arith.addf %4, %5 : vector<8x256xf32>
    %cst = arith.constant 5.000000e-01 : f32
    %7 = vector.broadcast %cst : f32 to vector<8x256xf32>
    %8 = arith.mulf %7, %6 : vector<8x256xf32>
    %cst_3 = arith.constant 0.707106769 : f32
    %9 = vector.broadcast %cst_3 : f32 to vector<8x256xf32>
    %10 = arith.mulf %6, %9 : vector<8x256xf32>
    %11 = math.absf %10 : vector<8x256xf32>
    %cst_4 = arith.constant 0.327591091 : f32
    %12 = vector.broadcast %cst_4 : f32 to vector<8x256xf32>
    %13 = arith.mulf %12, %11 : vector<8x256xf32>
    %cst_5 = arith.constant 1.000000e+00 : f32
    %14 = vector.broadcast %cst_5 : f32 to vector<8x256xf32>
    %15 = arith.addf %14, %13 : vector<8x256xf32>
    %16 = tpu.reciprocal %15 {approx = true} : vector<8x256xf32> -> vector<8x256xf32>
    %17 = arith.mulf %15, %16 : vector<8x256xf32>
    %cst_6 = arith.constant 2.000000e+00 : f32
    %18 = vector.broadcast %cst_6 : f32 to vector<8x256xf32>
    %19 = arith.subf %18, %17 : vector<8x256xf32>
    %20 = arith.mulf %16, %19 : vector<8x256xf32>
    %cst_7 = arith.constant 1.06140542 : f32
    %21 = vector.broadcast %cst_7 : f32 to vector<8x256xf32>
    %22 = arith.mulf %20, %21 : vector<8x256xf32>
    %cst_8 = arith.constant -1.45315206 : f32
    %23 = vector.broadcast %cst_8 : f32 to vector<8x256xf32>
    %24 = arith.addf %23, %22 : vector<8x256xf32>
    %25 = arith.mulf %20, %24 : vector<8x256xf32>
    %cst_9 = arith.constant 1.42141378 : f32
    %26 = vector.broadcast %cst_9 : f32 to vector<8x256xf32>
    %27 = arith.addf %26, %25 : vector<8x256xf32>
    %28 = arith.mulf %20, %27 : vector<8x256xf32>
    %cst_10 = arith.constant -0.284496725 : f32
    %29 = vector.broadcast %cst_10 : f32 to vector<8x256xf32>
    %30 = arith.addf %29, %28 : vector<8x256xf32>
    %31 = arith.mulf %20, %30 : vector<8x256xf32>
    %cst_11 = arith.constant 0.254829586 : f32
    %32 = vector.broadcast %cst_11 : f32 to vector<8x256xf32>
    %33 = arith.addf %32, %31 : vector<8x256xf32>
    %34 = arith.mulf %20, %33 : vector<8x256xf32>
    %cst_12 = arith.constant 0.000000e+00 : f32
    %35 = vector.broadcast %cst_12 : f32 to vector<8x256xf32>
    %36 = arith.subf %35, %11 : vector<8x256xf32>
    %37 = arith.mulf %36, %11 : vector<8x256xf32>
    %38 = math.exp %37 : vector<8x256xf32>
    %39 = arith.mulf %34, %38 : vector<8x256xf32>
    %cst_13 = arith.constant 1.000000e+00 : f32
    %40 = vector.broadcast %cst_13 : f32 to vector<8x256xf32>
    %41 = arith.subf %40, %39 : vector<8x256xf32>
    %cst_14 = arith.constant 0.000000e+00 : f32
    %42 = vector.broadcast %cst_14 : f32 to vector<8x256xf32>
    %43 = arith.cmpf oge, %10, %42 : vector<8x256xf32>
    %cst_15 = arith.constant 0.000000e+00 : f32
    %44 = vector.broadcast %cst_15 : f32 to vector<8x256xf32>
    %45 = arith.subf %44, %41 : vector<8x256xf32>
    %46 = arith.select %43, %41, %45 : vector<8x256xi1>, vector<8x256xf32>
    %cst_16 = arith.constant 1.000000e+00 : f32
    %47 = vector.broadcast %cst_16 : f32 to vector<8x256xf32>
    %48 = arith.addf %47, %46 : vector<8x256xf32>
    %49 = arith.mulf %8, %48 : vector<8x256xf32>
    %cst_17 = arith.constant dense<0.000000e+00> : vector<8xf32>
    %50 = vector.multi_reduction <add>, %49, %cst_17 [1] : vector<8x256xf32> to vector<8xf32>
    %51 = vector.shape_cast %50 : vector<8xf32> to vector<8x1xf32>
    %cst_18 = arith.constant 3.906250e-03 : f32
    %52 = vector.broadcast %cst_18 : f32 to vector<8x1xf32>
    %53 = arith.mulf %51, %52 : vector<8x1xf32>
    %54 = arith.mulf %49, %49 : vector<8x256xf32>
    %cst_19 = arith.constant dense<0.000000e+00> : vector<8xf32>
    %55 = vector.multi_reduction <add>, %54, %cst_19 [1] : vector<8x256xf32> to vector<8xf32>
    %56 = vector.shape_cast %55 : vector<8xf32> to vector<8x1xf32>
    %cst_20 = arith.constant 3.906250e-03 : f32
    %57 = vector.broadcast %cst_20 : f32 to vector<8x1xf32>
    %58 = arith.mulf %56, %57 : vector<8x1xf32>
    %59 = arith.mulf %53, %53 : vector<8x1xf32>
    %60 = arith.subf %58, %59 : vector<8x1xf32>
    %cst_21 = arith.constant 0.000000e+00 : f32
    %61 = vector.broadcast %cst_21 : f32 to vector<8x1xf32>
    %62 = arith.maximumf %60, %61 : vector<8x1xf32>
    %cst_22 = arith.constant 9.99999974E-6 : f32
    %63 = vector.broadcast %cst_22 : f32 to vector<8x1xf32>
    %64 = arith.addf %62, %63 : vector<8x1xf32>
    %65 = math.rsqrt %64 : vector<8x1xf32>
    %66 = arith.mulf %1, %65 : vector<8x1xf32>
    %67 = arith.mulf %53, %66 : vector<8x1xf32>
    %68 = arith.subf %2, %67 : vector<8x1xf32>
    %69 = vector.broadcast %66 : vector<8x1xf32> to vector<8x256xf32>
    %70 = arith.mulf %49, %69 : vector<8x256xf32>
    %71 = vector.broadcast %68 : vector<8x1xf32> to vector<8x256xf32>
    %72 = arith.addf %70, %71 : vector<8x256xf32>
    %c0_23 = arith.constant 0 : index
    %c0_24 = arith.constant 0 : index
    %73 = vector.load %arg3[%c0_23, %c0_24] : memref<8x256xf32, #tpu.memory_space<vmem>>, vector<8x256xf32>
    tpu.vector_store %arg3[%c0_23, %c0_24], %72 {strides = array<i32>} : memref<8x256xf32, #tpu.memory_space<vmem>>, vector<8x256xf32>,
    return
  }
  func.func @transform_0(%arg0: i32) -> (i32, i32) {
    %c0_i32 = arith.constant 0 : i32
    %c0_i32_0 = arith.constant 0 : i32
    return %arg0, %c0_i32 : i32, i32
  }
  func.func @transform_1(%arg0: i32) -> (i32, i32) {
    %c0_i32 = arith.constant 0 : i32
    %c0_i32_0 = arith.constant 0 : i32
    return %arg0, %c0_i32 : i32, i32
  }
  func.func @transform_2(%arg0: i32) -> (i32, i32) {
    %c0_i32 = arith.constant 0 : i32
    %c0_i32_0 = arith.constant 0 : i32
    return %arg0, %c0_i32 : i32, i32
  }
}

</mosaic_0001>

<llo_original>
// kernel: tpu_custom_call.1
$region0: #{tpu_custom_call.1}
  #allocation0 [shape = 'u32[]', space=smem, size = 0x4, offset = 0x4, fixed_abs, tag = 'smem constant byte address 0x4 - core index']
  #allocation1 [shape = 'u32[144,128]{1,0:T(1,128)}', space=vmem, size = 0x12000, scoped, tag = 'internal scratch']
  %s0 = inlined_call_operand.hbm [shape: f32[8,256], index: 0, kind: input, shape index: {}]
  %s1 = inlined_call_operand.vmem [shape: f32[8,3], index: 1, kind: input, shape index: {}]
  %s2 = inlined_call_operand.hbm [shape: f32[8,256], index: 2, kind: output, shape index: {}]
  %s3 = sld [smem:[#allocation0]]
  $region22: #{tpu_custom_call.1} parent=0
    _
  %s5 = ssub.s32 1, %s3
  %s6 = scalar_select 0, %s5, %s3
  $region1: #{tpu_custom_call.1} parent=0
    #allocation2 [shape = 'u8[8192]{0}', space=vmem, size = 0x2000, scoped, tag = 'input window, operand 0, single buffered']
    #allocation3 [shape = 's32[1]{0}', space=sflag, size = 0x4, scoped, tag = 'scoped memory for tpu_custom_call.1']
    #allocation4 [shape = 's32[1]{0}', space=sflag, size = 0x4, scoped, tag = 'scoped memory for tpu_custom_call.1']
    #allocation5 [shape = 'u8[8192]{0}', space=vmem, size = 0x2000, scoped, tag = 'output window, operand 0, single buffered']
    %7 = vsyncpa [#allocation3], 0
    %8 = vsyncpa [#allocation4], 0
    // Predicated region
    $region2: #{tpu_custom_call.1} parent=1 // pred_check
      _
    $region3: #{tpu_custom_call.1} parent=1 // pred_check_branch
      %10 = sbr.rel (0) target = $region5
    $region4: #{tpu_custom_call.1} parent=1 // pred_region
      %s12 = ssub.s32 256, 256
      %13 = vsyncadd [#allocation3], %s12
      %s15 = sshll.u32 [#allocation2], 4
      %s16 = int_to_ptr.vmem [resolvable:$true] %s15
      %18 = dma.hbm_to_vmem [thread:$0]  %s0, 256, %s16, [#allocation3]
    $region5: #{tpu_custom_call.1} parent=1 // pred_fallthru
      _
    // Predicated region
    $region6: #{tpu_custom_call.1} parent=1 // pred_check
      _
    $region7: #{tpu_custom_call.1} parent=1 // pred_check_branch
      %20 = sbr.rel (0) target = $region9
    $region8: #{tpu_custom_call.1} parent=1 // pred_region
      _
    $region9: #{tpu_custom_call.1} parent=1 // pred_fallthru
      _
    // Predicated region
    $region10: #{tpu_custom_call.1} parent=1 // pred_check
      _
    $region11: #{tpu_custom_call.1} parent=1 // pred_check_branch
      %22 = sbr.rel (0) target = $region13
    $region12: #{tpu_custom_call.1} parent=1 // pred_region
      %23 = dma.done [#allocation3], 256
    $region13: #{tpu_custom_call.1} parent=1 // pred_fallthru
      _
    %v24 = vld [vmem:[%s1] sm:$0xff]
    %v25 = vld [vmem:[#allocation2] sm:$0xff]
    %v26 = vld [vmem:[#allocation2 + $0x8] sm:$0xff]
    %28 = vset.pattern.permute.xlu0 2
    %29 = vperm.xlu0 %28, %v24
    %v30 = vpop.permute.xlu0 %29
    %v32 = vadd.f32 %v25, %v30
    %v33 = vadd.f32 %v26, %v30
    %v34 = vmul.f32 %v32, 0.5
    %v35 = vmul.f32 %v33, 0.5
    %v36 = vmul.f32 %v32, 0.70710677
    %v37 = vmul.f32 %v33, 0.70710677
    %v38 = vand.u32 2147483647, %v36
    %v39 = vand.u32 2147483647, %v37
    %v40 = vmul.f32 %v38, 0.3275911
    %v41 = vmul.f32 %v39, 0.3275911
    %v42 = vadd.f32 %v40, 1.0
    %v43 = vadd.f32 %v41, 1.0
    %v44 = vrcp.pop %v42
    %v45 = vrcp.pop %v43
    %v46 = vmul.f32 %v42, %v44
    %v47 = vmul.f32 %v43, %v45
    %v48 = vsub.f32 2.0, %v46
    %v49 = vsub.f32 2.0, %v47
    %v50 = vmul.f32 %v44, %v48
    %v51 = vmul.f32 %v45, %v49
    %v52 = vmul.f32 %v50, 1.0614054
    %v53 = vmul.f32 %v51, 1.0614054
    %v54 = vadd.f32 %v52, -1.4531521
    %v55 = vadd.f32 %v53, -1.4531521
    %v56 = vmul.f32 %v50, %v54
    %v57 = vmul.f32 %v51, %v55
    %v58 = vadd.f32 %v56, 1.4214138
    %v59 = vadd.f32 %v57, 1.4214138
    %v60 = vmul.f32 %v50, %v58
    %v61 = vmul.f32 %v51, %v59
    %v62 = vadd.f32 %v60, -0.28449672
    %v63 = vadd.f32 %v61, -0.28449672
    %v64 = vmul.f32 %v50, %v62
    %v65 = vmul.f32 %v51, %v63
    %v66 = vadd.f32 %v64, 0.2548296
    %v67 = vadd.f32 %v65, 0.2548296
    %v68 = vmul.f32 %v50, %v66
    %v69 = vmul.f32 %v51, %v67
    %v70 = vsub.f32 0.0, %v38
    %v71 = vsub.f32 0.0, %v39
    %v72 = vmul.f32 %v70, %v38
    %v73 = vmul.f32 %v71, %v39
    %v74 = vmul.f32 %v72, 1.442695
    %v75 = vpow.pop %v74
    %v76 = vmul.f32 %v73, 1.442695
    %v77 = vpow.pop %v76
    %v78 = vmul.f32 %v68, %v75
    %v79 = vmul.f32 %v69, %v77
    %v80 = vsub.f32 1.0, %v78
    %v81 = vsub.f32 1.0, %v79
    %vm82 = vcmp.ge.f32.partialorder %v36, 0.0
    %vm83 = vcmp.ge.f32.partialorder %v37, 0.0
    %v84 = vsub.f32 0.0, %v80
    %v85 = vsub.f32 0.0, %v81
    %v86 = vsel %vm82, %v80, %v84
    %v87 = vsel %vm83, %v81, %v85
    %v88 = vadd.f32 %v86, 1.0
    %v89 = vadd.f32 %v87, 1.0
    %v90 = vmul.f32 %v34, %v88
    %v91 = vmul.f32 %v35, %v89
    %v92 = vadd.f32 %v90, %v91
    %93 = vadd.xlane.f32.xlu0 %v92
    %v94 = vpop.xlane.xlu0 %93
    %v95 = vmul.f32 %v94, 0.00390625
    %v96 = vmul.f32 %v90, %v90
    %v97 = vmul.f32 %v91, %v91
    %v98 = vadd.f32 %v96, %v97
    %99 = vadd.xlane.f32.xlu0 %v98
    %v100 = vpop.xlane.xlu0 %99
    %v101 = vmul.f32 %v100, 0.00390625
    %v102 = vmul.f32 %v95, %v95
    %v103 = vsub.f32 %v101, %v102
    %v104 = vmax.f32 %v103, 0.0
    %v105 = vadd.f32 %v104, 1e-05
    %v106 = vrsqrt.pop %v105
    %v107 = vmul.f32 %v24, %v106
    %v108 = vmul.f32 %v95, %v107
    %110 = vrot.lane.b32.xlu0 %v108, 1
    %v111 = vpop.permute.xlu0 %110
    %v113 = vsub.f32 %v24, %v111
    %115 = vset.pattern.permute.xlu0 0
    %116 = vperm.xlu0 %115, %v107
    %v117 = vpop.permute.xlu0 %116
    %v119 = vmul.f32 %v90, %v117
    %v120 = vmul.f32 %v91, %v117
    %122 = vset.pattern.permute.xlu0 1
    %123 = vperm.xlu0 %122, %v113
    %v124 = vpop.permute.xlu0 %123
    %v126 = vadd.f32 %v119, %v124
    %v127 = vadd.f32 %v120, %v124
    %128 = vst [vmem:[#allocation5] sm:$0xff] %v126
    %129 = vst [vmem:[#allocation5 + $0x8] sm:$0xff] %v127
    // Predicated region
    $region14: #{tpu_custom_call.1} parent=1 // pred_check
      _
    $region15: #{tpu_custom_call.1} parent=1 // pred_check_branch
      %131 = sbr.rel (0) target = $region17
    $region16: #{tpu_custom_call.1} parent=1 // pred_region
      %s133 = ssub.s32 256, 256
      %134 = vsyncadd [#allocation4], %s133
      %s136 = sshll.u32 [#allocation5], 4
      %s137 = int_to_ptr.vmem [resolvable:$true] %s136
      %139 = dma.vmem_to_hbm [thread:$0]  %s137, 256, %s2, [#allocation4]
    $region17: #{tpu_custom_call.1} parent=1 // pred_fallthru
      _
    // Predicated region
    $region18: #{tpu_custom_call.1} parent=1 // pred_check
      _
    $region19: #{tpu_custom_call.1} parent=1 // pred_check_branch
      %141 = sbr.rel (0) target = $region21
    $region20: #{tpu_custom_call.1} parent=1 // pred_region
      %142 = dma.done [#allocation4], 256
    $region21: #{tpu_custom_call.1} parent=1 // pred_fallthru
      _
    %143 = vsyncpa [#allocation3], 1
    %144 = vsyncpa [#allocation4], 1

</llo_original>
